<compile_context>
chip_gen: v7x
topology: tpu7x:2x2x1
jax: 0.10.0
libtpu: 0.0.40
codegen_flags: <defaults>
</compile_context>

<pallas_src>
import math
from functools import partial, lru_cache

import jax
import jax.numpy as jnp
from jax.experimental import pallas as pl
from jax.experimental.pallas import tpu as pltpu

EXP = 4            # Bottleneck.expansion
NEG_INF = -1e30
VMEM_LIMIT = 32 * 1024 * 1024


def _round_up(x, m):
    return ((x + m - 1) // m) * m


def _cdiv(a, b):
    return -(-a // b)


def _choose_tk(Kp):
    if Kp <= 512:
        return Kp
    for cand in (1024, 768, 512, 384, 256, 128):   # multiples of 128 only
        if Kp % cand == 0:
            return cand
    return Kp


def _choose_tn(Np):
    if Np <= 256:
        return Np
    if Np >= 1024 and Np % 512 == 0:
        return 512
    if Np % 256 == 0:
        return 256
    return 128


def _choose_tm(M):
    """Prefer a divisor of M (multiple of 8, <=512) so no M-pad copy is needed."""
    if M <= 512:
        return _round_up(M, 8)
    for d in range(512, 127, -8):
        if M % d == 0:
            return d
    return 512


# ----------------------------------------------------------------------------
# Pallas kernel 1: tiled matmul (bf16 MXU, f32 accum) + bias [+row-scale]
#                  [+residual] + activation, K as an in-kernel reduction axis.
# ----------------------------------------------------------------------------
def _conv_mm_kernel(p_ref, w_ref, b_ref, *rest, act, has_rs, has_res):
    pos = 0
    rs_ref = rest[pos] if has_rs else None
    pos += 1 if has_rs else 0
    res_ref = rest[pos] if has_res else None
    pos += 1 if has_res else 0
    o_ref, acc_ref = rest[pos], rest[pos + 1]

    k = pl.program_id(2)

    @pl.when(k == 0)
    def _init():
        acc_ref[...] = jnp.zeros_like(acc_ref)

    acc_ref[...] += jnp.dot(p_ref[...], w_ref[...],
                            preferred_element_type=jnp.float32)

    @pl.when(k == pl.num_programs(2) - 1)
    def _finalize():
        out = acc_ref[...]
        if has_rs:                              # attention fusion: rows * (1+sig)
            out = out * rs_ref[...]
        out = out + b_ref[...]                  # folded BN bias (after row-scale!)
        if has_res:
            out = out + res_ref[...].astype(jnp.float32)
        if act == "relu":
            out = jnp.maximum(out, 0.0)
        elif act == "sigmoid":
            out = jax.nn.sigmoid(out)
        o_ref[...] = out.astype(o_ref.dtype)


@lru_cache(maxsize=None)
def _build_conv_mm(Mp, Kp, Np, TM, TK, TN, act, has_rs, has_res, out_dtype):
    in_specs = [
        pl.BlockSpec((TM, TK), lambda i, j, k: (i, k)),   # patches / 1x1 rows
        pl.BlockSpec((TK, TN), lambda i, j, k: (k, j)),   # weight (BN folded)
        pl.BlockSpec((1, TN), lambda i, j, k: (0, j)),    # bias
    ]
    if has_rs:
        in_specs.append(pl.BlockSpec((TM, 1), lambda i, j, k: (i, 0)))
    if has_res:
        in_specs.append(pl.BlockSpec((TM, TN), lambda i, j, k: (i, j)))
    kernel = partial(_conv_mm_kernel, act=act, has_rs=has_rs, has_res=has_res)
    return pl.pallas_call(
        kernel,
        out_shape=jax.ShapeDtypeStruct((Mp, Np), out_dtype),
        grid=(Mp // TM, Np // TN, Kp // TK),
        in_specs=in_specs,
        out_specs=pl.BlockSpec((TM, TN), lambda i, j, k: (i, j)),
        scratch_shapes=[pltpu.VMEM((TM, TN), jnp.float32)],
        compiler_params=pltpu.CompilerParams(
            dimension_semantics=("parallel", "parallel", "arbitrary"),
            vmem_limit_bytes=VMEM_LIMIT),
    )


def fused_matmul(Pm, cw, act=None, residual=None, row_scale=None,
                 out_dtype=jnp.bfloat16):
    """out = act((Pm @ W)[*row_scale] + bias [+residual]); Pm (M,Kp) -> (M,cout)."""
    M, Kin = Pm.shape
    Kp, Np, TK, TN = cw["Kp"], cw["Np"], cw["TK"], cw["TN"]
    cout = cw["cout"]
    assert Kin == Kp, (Kin, Kp)
    TM = _choose_tm(M)
    Mp = _round_up(M, TM)
    # v7x megacore: keep at least 2 tiles across the parallel axes when cheap.
    if Mp == TM and Np == TN and Np >= 256:
        TN = Np // 2

    if Mp != M:
        Pm = jnp.pad(Pm, ((0, Mp - M), (0, 0)))
    args = [Pm.astype(jnp.bfloat16), cw["wm"], cw["bias"]]
    if row_scale is not None:
        rs = row_scale.astype(jnp.float32).reshape(M, 1)
        if Mp != M:
            rs = jnp.pad(rs, ((0, Mp - M), (0, 0)))
        args.append(rs)
    if residual is not None:
        R = residual.astype(jnp.bfloat16)
        if Mp != M or Np != cout:
            R = jnp.pad(R, ((0, Mp - M), (0, Np - cout)))
        args.append(R)
    fn = _build_conv_mm(Mp, Kp, Np, TM, TK, TN, act,
                        row_scale is not None, residual is not None, out_dtype)
    out = fn(*args)
    if Mp != M or Np != cout:
        out = out[:M, :cout]
    return out


# ----------------------------------------------------------------------------
# Pallas kernel 1b: direct 3x3 stride-1 conv.  The padded NHWC image is read
# directly from HBM (pl.ANY); the 9 (dy,dx) offsets form the K-reduction grid
# axis and the LHS chunk for each offset is a contiguous run of rows of the
# flat image, fetched with a manual double-buffered DMA.  No im2col patches.
# ----------------------------------------------------------------------------
def _conv3x3_kernel(x_hbm, w_ref, b_ref, o_ref, lhs_buf, sem, acc_ref,
                    *, tm, wp, act):
    i = pl.program_id(0)
    q = pl.program_id(2)
    nq = pl.num_programs(2)
    slot = q % 2

    def start_fetch(qq, sl):
        start = i * tm + (qq // 3) * wp + (qq % 3)   # row shift = dy*Wp + dx
        pltpu.make_async_copy(x_hbm.at[pl.ds(start, tm)],
                              lhs_buf.at[sl], sem.at[sl]).start()

    @pl.when(q == 0)
    def _prime():
        acc_ref[...] = jnp.zeros_like(acc_ref)
        start_fetch(0, 0)

    # wait for this step's chunk (descriptor only needs matching shapes)
    pltpu.make_async_copy(x_hbm.at[pl.ds(0, tm)],
                          lhs_buf.at[slot], sem.at[slot]).wait()

    @pl.when(q < nq - 1)
    def _prefetch():
        start_fetch(q + 1, 1 - slot)

    acc_ref[...] += jnp.dot(lhs_buf[slot], w_ref[...],
                            preferred_element_type=jnp.float32)

    @pl.when(q == nq - 1)
    def _finalize():
        out = acc_ref[...] + b_ref[...]
        if act == "relu":
            out = jnp.maximum(out, 0.0)
        o_ref[...] = out.astype(o_ref.dtype)


@lru_cache(maxsize=None)
def _build_conv3x3(Cin, Mp, Np, TM, TN, Wp, act, out_dtype):
    kernel = partial(_conv3x3_kernel, tm=TM, wp=Wp, act=act)
    return pl.pallas_call(
        kernel,
        out_shape=jax.ShapeDtypeStruct((Mp, Np), out_dtype),
        grid=(Mp // TM, Np // TN, 9),
        in_specs=[
            pl.BlockSpec(memory_space=pl.ANY),                    # flat image (HBM)
            pl.BlockSpec((Cin, TN), lambda i, j, q: (q, j)),      # weight (9*Cin, Np)
            pl.BlockSpec((1, TN), lambda i, j, q: (0, j)),        # bias
        ],
        out_specs=pl.BlockSpec((TM, TN), lambda i, j, q: (i, j)),
        scratch_shapes=[
            pltpu.VMEM((2, TM, Cin), jnp.bfloat16),               # LHS double buffer
            pltpu.SemaphoreType.DMA((2,)),
            pltpu.VMEM((TM, TN), jnp.float32),                    # accumulator
        ],
        compiler_params=pltpu.CompilerParams(
            dimension_semantics=("parallel", "parallel", "arbitrary"),
            vmem_limit_bytes=VMEM_LIMIT),
    )


def conv3x3_direct(x, cw, act=None, out_dtype=jnp.bfloat16):
    N, H, W, C = x.shape
    cout, Np, TN = cw["cout"], cw["Np"], cw["TN"]
    Hp, Wp = H + 2, W + 2
    # rows of the flat padded image that cover every useful output anchor
    R_need = ((N - 1) * Hp + H) * Wp
    TM = 512 if R_need >= 512 else _round_up(R_need, 8)
    Mp = _round_up(R_need, TM)
    # extra zero "images" appended so the largest shifted DMA read stays in bounds
    nb = _cdiv(TM + 2 * Wp + 2, Hp * Wp)
    xp = jnp.pad(x.astype(jnp.bfloat16), ((0, nb), (1, 1), (1, 1), (0, 0)))
    Ttot = (N + nb) * Hp * Wp
    assert Mp + 2 * Wp + 2 <= Ttot
    X2 = xp.reshape(Ttot, C)                                   # free reshape
    fn = _build_conv3x3(C, Mp, Np, TM, TN, Wp, act, out_dtype)
    out_flat = fn(X2, cw["wm"], cw["bias"])                    # (Mp, Np), padded frame
    # gather the useful anchors (garbage frame rows are discarded)
    rows = ((jnp.arange(N)[:, None] * Hp + jnp.arange(H)[None, :])
            .reshape(-1, 1) * Wp + jnp.arange(W)[None, :]).reshape(-1)
    out = jnp.take(out_flat, rows, axis=0)
    if Np != cout:
        out = out[:, :cout]
    return out.reshape(N, H, W, cout)


# ----------------------------------------------------------------------------
# Pallas kernel 2: maxpool 3x3 / stride 2 / pad 1, reading the padded image once.
# W pairs are merged into the lane dim so all in-kernel accesses are contiguous.
# ----------------------------------------------------------------------------
def _maxpool_kernel(x_ref, o_ref, *, Ho, Wo, C):
    # x_ref block: (1, Ho+1, 2, Wo+1, 2C)
    @pl.loop(0, Ho)
    def _(h):
        a = x_ref[0, h, 0]          # (Wo+1, 2C): input rows 2h
        b = x_ref[0, h, 1]          #             rows 2h+1
        c = x_ref[0, h + 1, 0]      #             rows 2h+2
        r = jnp.maximum(jnp.maximum(a, b), c)
        ev, od = r[:, :C], r[:, C:]
        row = jnp.maximum(jnp.maximum(ev[0:Wo, :], od[0:Wo, :]), ev[1:Wo + 1, :])
        o_ref[0, h] = row.astype(o_ref.dtype)


@lru_cache(maxsize=None)
def _build_maxpool(N, Ho, Wo, C):
    kernel = partial(_maxpool_kernel, Ho=Ho, Wo=Wo, C=C)
    return pl.pallas_call(
        kernel,
        out_shape=jax.ShapeDtypeStruct((N, Ho, Wo, C), jnp.bfloat16),
        grid=(N,),
        in_specs=[pl.BlockSpec((1, Ho + 1, 2, Wo + 1, 2 * C),
                               lambda n: (n, 0, 0, 0, 0))],
        out_specs=pl.BlockSpec((1, Ho, Wo, C), lambda n: (n, 0, 0, 0)),
        compiler_params=pltpu.CompilerParams(
            dimension_semantics=("parallel",)),
    )


def maxpool_3x3_s2(x):
    N, H, W, C = x.shape
    Ho = (H - 1) // 2 + 1
    Wo = (W - 1) // 2 + 1
    Hp, Wp = 2 * Ho + 2, 2 * Wo + 2
    xp = jnp.pad(x, ((0, 0), (1, Hp - H - 1), (1, Wp - W - 1), (0, 0)),
                 constant_values=NEG_INF)
    xr = xp.reshape(N, Ho + 1, 2, Wo + 1, 2 * C)     # free reshape (W pairs -> lanes)
    return _build_maxpool(N, Ho, Wo, C)(xr)


# ----------------------------------------------------------------------------
# Pallas kernel 3: global max/avg pool, reducing H*W with a chunked grid axis
#                  accumulating into a resident (N, C) output (no transpose).
# ----------------------------------------------------------------------------
def _gpool_kernel(x_ref, o_ref, *, mode, denom):
    k = pl.program_id(0)

    @pl.when(k == 0)
    def _init():
        o_ref[...] = jnp.full(o_ref.shape,
                              NEG_INF if mode == "max" else 0.0, o_ref.dtype)

    x = x_ref[...].astype(jnp.float32)
    if mode == "max":
        o_ref[...] = jnp.maximum(o_ref[...], jnp.max(x, axis=1))
    else:
        o_ref[...] = o_ref[...] + jnp.sum(x, axis=1)

        @pl.when(k == pl.num_programs(0) - 1)
        def _final():
            o_ref[...] = o_ref[...] * (1.0 / denom)


@lru_cache(maxsize=None)
def _build_gpool(N, HWp, Cp, THW, mode, denom):
    kernel = partial(_gpool_kernel, mode=mode, denom=denom)
    return pl.pallas_call(
        kernel,
        out_shape=jax.ShapeDtypeStruct((N, Cp), jnp.float32),
        grid=(HWp // THW,),
        in_specs=[pl.BlockSpec((N, THW, Cp), lambda k: (0, k, 0))],
        out_specs=pl.BlockSpec((N, Cp), lambda k: (0, 0)),
        compiler_params=pltpu.CompilerParams(dimension_semantics=("arbitrary",)),
    )


def global_pool(x, mode):
    """NHWC -> (N, C): adaptive max/avg pool to 1x1 + flatten."""
    N, H, W, C = x.shape
    HW = H * W
    Cp = _round_up(C, 128)
    THW = min(_round_up(HW, 16), 1024)
    HWp = _round_up(HW, THW)
    pad_val = NEG_INF if mode == "max" else 0.0
    xr = jnp.pad(x.reshape(N, HW, C), ((0, 0), (0, HWp - HW), (0, Cp - C)),
                 constant_values=pad_val)
    return _build_gpool(N, HWp, Cp, THW, mode, float(HW))(xr)[:, :C]


# ----------------------------------------------------------------------------
# Conv wrappers (im2col only for strided / 7x7 / tiny-channel convs)
# ----------------------------------------------------------------------------
def _im2col(x, kh, kw, stride, pad, Kp):
    """Patch matrix built directly at Kp columns (zero block folded into concat)."""
    N, H, W, C = x.shape
    Ho = (H + 2 * pad - kh) // stride + 1
    Wo = (W + 2 * pad - kw) // stride + 1
    if kh == 1 and kw == 1 and pad == 0:
        xs = x[:, ::stride, ::stride, :] if stride > 1 else x
        P = xs.reshape(N * Ho * Wo, C)
        if Kp > C:
            P = jnp.pad(P, ((0, 0), (0, Kp - C)))
        return P, Ho, Wo
    # TODO(synk): stride-2 3x3 and the 7x7 stem still materialize kh*kw patches.
    xp = jnp.pad(x, ((0, 0), (pad, pad), (pad, pad), (0, 0)))
    cols = [xp[:, dy:dy + stride * Ho:stride, dx:dx + stride * Wo:stride, :]
            for dy in range(kh) for dx in range(kw)]
    K = kh * kw * C
    if Kp > K:
        cols.append(jnp.zeros((N, Ho, Wo, Kp - K), x.dtype))
    return jnp.concatenate(cols, axis=-1).reshape(N * Ho * Wo, Kp), Ho, Wo


def conv_bn_act(x, cw, stride=1, pad=0, act=None, residual=None,
                row_scale=None, out_dtype=jnp.bfloat16):
    """NHWC conv (BN folded into cw) with fused epilogue."""
    N, H, W, C = x.shape
    assert C == cw["cin"], (C, cw["cin"])
    kh, kw = cw["kh"], cw["kw"]
    if (kh == 3 and kw == 3 and stride == 1 and pad == 1 and C % 8 == 0
            and residual is None and row_scale is None):
        return conv3x3_direct(x, cw, act=act, out_dtype=out_dtype)
    Pm, Ho, Wo = _im2col(x, kh, kw, stride, pad, cw["Kp"])
    R = residual.reshape(N * Ho * Wo, cw["cout"]) if residual is not None else None
    rs = row_scale.reshape(N * Ho * Wo, 1) if row_scale is not None else None
    out = fused_matmul(Pm, cw, act=act, residual=R, row_scale=rs,
                       out_dtype=out_dtype)
    return out.reshape(N, Ho, Wo, cw["cout"])


# ----------------------------------------------------------------------------
# Deterministic parameters (mirrors the torch __init__ shapes; BN folded & padded)
# ----------------------------------------------------------------------------
class ParamGen:
    def __init__(self, seed):
        self.key = jax.random.PRNGKey(seed)
        self.i = 0

    def normal(self, shape):
        self.i += 1
        return jax.random.normal(jax.random.fold_in(self.key, self.i), shape,
                                 dtype=jnp.float32)


def make_conv_w(pg, cin, cout, k):
    fan_in = cin * k * k
    return pg.normal((k, k, cin, cout)) / math.sqrt(fan_in)


def make_bn(pg, c):
    gamma = 1.0 + 0.1 * pg.normal((c,))
    beta = 0.1 * pg.normal((c,))
    mean = 0.1 * pg.normal((c,))
    var = 1.0 + 0.1 * jnp.abs(pg.normal((c,)))
    scale = gamma / jnp.sqrt(var + 1e-5)
    bias = beta - mean * scale
    return scale, bias


def prepare_conv(w, scale, bias):
    """Fold BN scale into weight columns; pad/cast once at build time."""
    kh, kw, cin, cout = w.shape
    K, Nc = kh * kw * cin, cout
    wm = w.reshape(K, Nc).astype(jnp.float32) * scale.astype(jnp.float32)[None, :]
    Kp = K if K % 8 == 0 else _round_up(K, 8)
    Np = _round_up(Nc, 128)
    wm = jnp.pad(wm, ((0, Kp - K), (0, Np - Nc))).astype(jnp.bfloat16)
    bp = jnp.pad(bias.astype(jnp.float32).reshape(1, Nc), ((0, 0), (0, Np - Nc)))
    return dict(wm=wm, bias=bp, kh=kh, kw=kw, cin=cin, cout=cout,
                Kp=Kp, Np=Np, TK=_choose_tk(Kp), TN=_choose_tn(Np))


def make_conv_bn(pg, cin, cout, k):
    w = make_conv_w(pg, cin, cout, k)
    scale, bias = make_bn(pg, cout)
    return prepare_conv(w, scale, bias)


def make_bottleneck(pg, inplanes, planes, stride, with_ds):
    p = {"stride": stride,
         "c1": make_conv_bn(pg, inplanes, planes, 1),
         "c2": make_conv_bn(pg, planes, planes, 3),
         "c3": make_conv_bn(pg, planes, planes * EXP, 1)}
    if with_ds:
        p["cd"] = make_conv_bn(pg, inplanes, planes * EXP, 1)
    return p


def make_layer(pg, inplanes, planes, blocks, stride=1, down_size=True):
    with_ds = (stride != 1) or (inplanes != planes * EXP)
    layer = [make_bottleneck(pg, inplanes, planes, stride, with_ds)]
    inner = planes * EXP
    for _ in range(1, blocks):
        layer.append(make_bottleneck(pg, inner, planes, 1, False))
    return layer, (inner if down_size else inplanes)


def make_att_head(pg, inplanes, planes, blocks, n_class):
    feat_layer, _ = make_layer(pg, inplanes, planes, blocks, stride=1,
                               down_size=False)
    cexp = planes * EXP
    sa, ba = make_bn(pg, cexp)                 # BN before the 1x1 class conv
    w_c = make_conv_w(pg, cexp, n_class, 1).reshape(cexp, n_class)
    sb, bb = make_bn(pg, n_class)              # BN after the 1x1 class conv
    # fold leading BN into the conv rows, trailing BN into scale/bias
    # (valid: no nonlinearity sits between that BN and the conv in the reference)
    w_eff = (w_c * sa[:, None]).reshape(1, 1, cexp, n_class)
    b_pre = ba @ w_c
    c_feat = prepare_conv(w_eff, sb, b_pre * sb + bb)
    # Fused att_soft (1x1, centre-tap) + att_sig (3x3 + BN) conv on `feat`.
    w_soft = make_conv_w(pg, n_class, n_class, 1)          # (1,1,n,n)
    w_sig = make_conv_w(pg, n_class, 1, 3)                 # (3,3,n,1)
    s_sig, b_sig = make_bn(pg, 1)
    w_comb = jnp.zeros((3, 3, n_class, n_class + 1), jnp.float32)
    w_comb = w_comb.at[1, 1, :, :n_class].set(w_soft[0, 0])
    w_comb = w_comb.at[:, :, :, n_class:].set(w_sig)
    scale_comb = jnp.concatenate([jnp.ones((n_class,)), s_sig])
    bias_comb = jnp.concatenate([jnp.zeros((n_class,)), b_sig])
    c_comb = prepare_conv(w_comb, scale_comb, bias_comb)
    return dict(feat=feat_layer, c_feat=c_feat, c_comb=c_comb)


def build_params(seed, n_class=7):
    pg = ParamGen(seed)
    P = {"conv1": make_conv_bn(pg, 3, 64, 7)}
    inplanes = 64
    P["att0"] = make_att_head(pg, inplanes, 64, 3, n_class)
    P["layer1"], inplanes = make_layer(pg, inplanes, 64, 3, 1, True)      # -> 256
    P["att1"] = make_att_head(pg, inplanes, 128, 4, n_class)
    P["layer2"], inplanes = make_layer(pg, inplanes, 128, 4, 2, True)     # -> 512
    P["att2"] = make_att_head(pg, inplanes, 256, 6, n_class)
    P["layer3"], inplanes = make_layer(pg, inplanes, 256, 6, 2, True)     # -> 1024
    P["att3"] = make_att_head(pg, inplanes, 512, 3, n_class)
    P["layer4"], inplanes = make_layer(pg, inplanes, 512, 3, 2, True)     # -> 2048
    P["fc_w"] = pg.normal((512 * EXP, n_class)) / math.sqrt(512 * EXP)
    P["fc_b"] = 0.01 * pg.normal((n_class,))
    return P


# ----------------------------------------------------------------------------
# Forward pass
# ----------------------------------------------------------------------------
def bottleneck_fwd(p, x, row_scale=None):
    s = p["stride"]
    # row_scale (= 1 + sigmoid) implements x*sig + x fused into the 1x1 epilogues
    out = conv_bn_act(x, p["c1"], stride=1, pad=0, act="relu",
                      row_scale=row_scale)
    out = conv_bn_act(out, p["c2"], stride=s, pad=1, act="relu")
    if "cd" in p:
        rs_d = None
        if row_scale is not None:
            rs_d = row_scale[:, ::s, ::s, :] if s > 1 else row_scale
        residual = conv_bn_act(x, p["cd"], stride=s, pad=0, act=None,
                               row_scale=rs_d)
    else:
        if row_scale is not None:   # not hit in this architecture; safe fallback
            residual = (x.astype(jnp.float32) * row_scale).astype(x.dtype)
        else:
            residual = x
    # conv3 + folded-BN + residual add + relu fused in one Pallas matmul
    return conv_bn_act(out, p["c3"], stride=1, pad=0, act="relu",
                       residual=residual)


def run_layer(layer_params, x, row_scale=None):
    for idx, bp in enumerate(layer_params):
        x = bottleneck_fwd(bp, x, row_scale=row_scale if idx == 0 else None)
    return x


def att_head_fwd(p, x, n_class):
    h = run_layer(p["feat"], x)
    feat = conv_bn_act(h, p["c_feat"], stride=1, pad=0, act="relu")
    # one fused 3x3 conv for both the soft (classes) and sigmoid (mask) branches
    comb = conv_bn_act(feat, p["c_comb"], stride=1, pad=1, act=None,
                       out_dtype=jnp.float32)                  # (N,H,W,n_class+1)
    soft = global_pool(comb[..., :n_class], "max")             # (N, n_class)
    sig = jax.nn.sigmoid(comb[..., n_class:])                  # (N,H,W,1) f32
    return soft, sig


def forward(P, x_nchw, n_class=7):
    x = jnp.transpose(x_nchw, (0, 2, 3, 1)).astype(jnp.bfloat16)   # NCHW -> NHWC

    # encoder0: conv7x7/2 + bn + relu + maxpool3x3/2
    x = conv_bn_act(x, P["conv1"], stride=2, pad=3, act="relu")
    x = maxpool_3x3_s2(x)

    softs = []
    for att_name, layer_name in (("att0", "layer1"), ("att1", "layer2"),
                                 ("att2", "layer3"), ("att3", "layer4")):
        soft, sig = att_head_fwd(P[att_name], x, n_class)
        softs.append(soft)
        x = run_layer(P[layer_name], x, row_scale=1.0 + sig)   # x = x*sig + x fused

    pooled = global_pool(x, "mean")                            # (N, 2048) f32
    # tiny classifier head kept in plain XLA f32 (precision of averaged features)
    logits = pooled @ P["fc_w"] + P["fc_b"]
    return (*softs, logits)


# ----------------------------------------------------------------------------
if __name__ == "__main__":
    n_class = 7
    params = build_params(seed=0, n_class=n_class)

    key = jax.random.PRNGKey(0)
    x = jax.random.normal(key, (2, 3, 16, 16), dtype=jnp.float32)  # NCHW like PyTorch

    outs = forward(params, x, n_class)
    outs = jax.block_until_ready(outs)

    s0, s1, s2, s3, logits = outs
    assert s0.shape == (2, n_class)
    assert s1.shape == (2, n_class)
    assert s2.shape == (2, n_class)
    assert s3.shape == (2, n_class)
    assert logits.shape == (2, n_class)
    assert all(bool(jnp.all(jnp.isfinite(o.astype(jnp.float32)))) for o in outs)

    print("KERNEL_OK")
</pallas_src>

<mosaic_0001>
module attributes {stable_mosaic.version = 11 : i64} {
  func.func @_conv_mm_kernel(%arg0: i32, %arg1: i32, %arg2: i32, %arg3: memref<128x152xbf16, #tpu.memory_space<vmem>>, %arg4: memref<152x128xbf16, #tpu.memory_space<vmem>>, %arg5: memref<1x128xf32, #tpu.memory_space<vmem>>, %arg6: memref<128x128xbf16, #tpu.memory_space<vmem>>, %arg7: memref<128x128xf32, #tpu.memory_space<vmem>>) attributes {dimension_semantics = [#tpu.dimension_semantics<parallel>, #tpu.dimension_semantics<parallel>, #tpu.dimension_semantics<arbitrary>], iteration_bounds = array<i64: 1, 1, 1>, scalar_prefetch = 0 : i64, scratch_operands = 1 : i64, tpu.core_type = #tpu.core_type<tc>, window_params = [{transform_indices = @transform_0, window_bounds = array<i64: 128, 152>}, {transform_indices = @transform_1, window_bounds = array<i64: 152, 128>}, {transform_indices = @transform_2, window_bounds = array<i64: 1, 128>}, {transform_indices = @transform_3, window_bounds = array<i64: 128, 128>}]} {
    %c0_i32 = arith.constant 0 : i32
    %0 = arith.cmpi eq, %arg2, %c0_i32 : i32
    %1 = arith.extui %0 : i1 to i32
    %c0_i32_0 = arith.constant 0 : i32
    %2 = arith.cmpi ne, %1, %c0_i32_0 : i32
    scf.if %2 {
      %cst_10 = arith.constant 0.000000e+00 : f32
      %12 = vector.broadcast %cst_10 : f32 to vector<128x128xf32>
      %c0_11 = arith.constant 0 : index
      %c0_12 = arith.constant 0 : index
      %13 = vector.load %arg7[%c0_11, %c0_12] : memref<128x128xf32, #tpu.memory_space<vmem>>, vector<128x128xf32>
      tpu.vector_store %arg7[%c0_11, %c0_12], %12 {strides = array<i32>} : memref<128x128xf32, #tpu.memory_space<vmem>>, vector<128x128xf32>,
    } else {
    }
    %c0 = arith.constant 0 : index
    %c0_1 = arith.constant 0 : index
    %3 = vector.load %arg7[%c0, %c0_1] : memref<128x128xf32, #tpu.memory_space<vmem>>, vector<128x128xf32>
    %c0_2 = arith.constant 0 : index
    %c0_3 = arith.constant 0 : index
    %4 = vector.load %arg3[%c0_2, %c0_3] : memref<128x152xbf16, #tpu.memory_space<vmem>>, vector<128x152xbf16>
    %c0_4 = arith.constant 0 : index
    %c0_5 = arith.constant 0 : index
    %5 = vector.load %arg4[%c0_4, %c0_5] : memref<152x128xbf16, #tpu.memory_space<vmem>>, vector<152x128xbf16>
    %cst = arith.constant dense<0.000000e+00> : vector<128x128xf32>
    %6 = tpu.matmul %4, %5, %cst {dimension_numbers = #tpu.dot_dimension_numbers<[1], [0], [0], [1], [0, 0, 1, 1], [], []>} : vector<128x152xbf16>, vector<152x128xbf16>, vector<128x128xf32> -> vector<128x128xf32>
    %7 = arith.addf %3, %6 : vector<128x128xf32>
    %c0_6 = arith.constant 0 : index
    %c0_7 = arith.constant 0 : index
    %8 = vector.load %arg7[%c0_6, %c0_7] : memref<128x128xf32, #tpu.memory_space<vmem>>, vector<128x128xf32>
    tpu.vector_store %arg7[%c0_6, %c0_7], %7 {strides = array<i32>} : memref<128x128xf32, #tpu.memory_space<vmem>>, vector<128x128xf32>,
    %c0_i32_8 = arith.constant 0 : i32
    %9 = arith.cmpi eq, %arg2, %c0_i32_8 : i32
    %10 = arith.extui %9 : i1 to i32
    %c0_i32_9 = arith.constant 0 : i32
    %11 = arith.cmpi ne, %10, %c0_i32_9 : i32
    scf.if %11 {
      %c0_10 = arith.constant 0 : index
      %c0_11 = arith.constant 0 : index
      %12 = vector.load %arg7[%c0_10, %c0_11] : memref<128x128xf32, #tpu.memory_space<vmem>>, vector<128x128xf32>
      %c0_12 = arith.constant 0 : index
      %c0_13 = arith.constant 0 : index
      %13 = vector.load %arg5[%c0_12, %c0_13] : memref<1x128xf32, #tpu.memory_space<vmem>>, vector<1x128xf32>
      %14 = vector.broadcast %13 : vector<1x128xf32> to vector<128x128xf32>
      %15 = arith.addf %12, %14 : vector<128x128xf32>
      %cst_14 = arith.constant 0.000000e+00 : f32
      %16 = vector.broadcast %cst_14 : f32 to vector<128x128xf32>
      %17 = arith.maximumf %15, %16 : vector<128x128xf32>
      %18 = arith.truncf %17 : vector<128x128xf32> to vector<128x128xbf16>
      %c0_15 = arith.constant 0 : index
      %c0_16 = arith.constant 0 : index
      %19 = vector.load %arg6[%c0_15, %c0_16] : memref<128x128xbf16, #tpu.memory_space<vmem>>, vector<128x128xbf16>
      tpu.vector_store %arg6[%c0_15, %c0_16], %18 {strides = array<i32>} : memref<128x128xbf16, #tpu.memory_space<vmem>>, vector<128x128xbf16>,
    } else {
    }
    return
  }
  func.func @transform_0(%arg0: i32, %arg1: i32, %arg2: i32) -> (i32, i32) {
    %c0_i32 = arith.constant 0 : i32
    return %arg0, %arg2 : i32, i32
  }
  func.func @transform_1(%arg0: i32, %arg1: i32, %arg2: i32) -> (i32, i32) {
    %c0_i32 = arith.constant 0 : i32
    return %arg2, %arg1 : i32, i32
  }
  func.func @transform_2(%arg0: i32, %arg1: i32, %arg2: i32) -> (i32, i32) {
    %c0_i32 = arith.constant 0 : i32
    %c0_i32_0 = arith.constant 0 : i32
    return %c0_i32, %arg1 : i32, i32
  }
  func.func @transform_3(%arg0: i32, %arg1: i32, %arg2: i32) -> (i32, i32) {
    %c0_i32 = arith.constant 0 : i32
    return %arg0, %arg1 : i32, i32
  }
}

</mosaic_0001>

<llo_original>
// kernel: tpu_custom_call.1
$region0: #{tpu_custom_call.1}
  #allocation0 [shape = 'u32[]', space=smem, size = 0x4, offset = 0x4, fixed_abs, tag = 'smem constant byte address 0x4 - core index']
  #allocation1 [shape = 'u32[144,128]{1,0:T(1,128)}', space=vmem, size = 0x12000, scoped, tag = 'internal scratch']
  #allocation2 [shape = 'f32[128,128]{1,0:T(8,128)}', space=vmem, size = 0x10000, scoped, tag = 'scratch operand']
  %s0 = inlined_call_operand.vmem [shape: bf16[128,152], index: 0, kind: input, shape index: {}]
  %s1 = inlined_call_operand.vmem [shape: bf16[152,128], index: 1, kind: input, shape index: {}]
  %s2 = inlined_call_operand.vmem [shape: f32[1,128], index: 2, kind: input, shape index: {}]
  %s3 = inlined_call_operand.hbm [shape: bf16[128,128], index: 3, kind: output, shape index: {}]
  %s4 = sld [smem:[#allocation0]]
  $region30: #{tpu_custom_call.1} parent=0
    _
  %s6 = ssub.s32 1, %s4
  %s7 = scalar_select 0, %s6, %s4
  $region1: #{tpu_custom_call.1} parent=0
    #allocation3 [shape = 'u8[32768]{0}', space=vmem, size = 0x8000, scoped, tag = 'output window, operand 0, single buffered']
    #allocation4 [shape = 's32[1]{0}', space=sflag, size = 0x4, scoped, tag = 'scoped memory for tpu_custom_call.1']
    %8 = vsyncpa [#allocation4], 0
    // Predicated region
    $region2: #{tpu_custom_call.1} parent=1 // pred_check
      _
    $region3: #{tpu_custom_call.1} parent=1 // pred_check_branch
      %10 = sbr.rel (0) target = $region5
    $region4: #{tpu_custom_call.1} parent=1 // pred_region
      _
    $region5: #{tpu_custom_call.1} parent=1 // pred_fallthru
      _
    // Predicated region
    $region6: #{tpu_custom_call.1} parent=1 // pred_check
      _
    $region7: #{tpu_custom_call.1} parent=1 // pred_check_branch
      %12 = sbr.rel (0) target = $region9
    $region8: #{tpu_custom_call.1} parent=1 // pred_region
      _
    $region9: #{tpu_custom_call.1} parent=1 // pred_fallthru
      _
    // Predicated region
    $region10: #{tpu_custom_call.1} parent=1 // pred_check
      _
    $region11: #{tpu_custom_call.1} parent=1 // pred_check_branch
      %14 = sbr.rel (0) target = $region13
    $region12: #{tpu_custom_call.1} parent=1 // pred_region
      _
    $region13: #{tpu_custom_call.1} parent=1 // pred_fallthru
      _
    %p16 = scmp.eq.s32.totalorder 0, 0
    // Predicated region
    $region14: #{tpu_custom_call.1} parent=1 // pred_check
      %p17 = pneg %p16
    $region15: #{tpu_custom_call.1} parent=1 // pred_check_branch
      %19 = sbr.rel (%p17) target = $region17
    $region16: #{tpu_custom_call.1} parent=1 // pred_region
      %20 = vst [vmem:[#allocation2] sm:$0xff] 0.0
      %21 = vst [vmem:[#allocation2 + $0x8] sm:$0xff] 0.0
      %22 = vst [vmem:[#allocation2 + $0x10] sm:$0xff] 0.0
      %23 = vst [vmem:[#allocation2 + $0x18] sm:$0xff] 0.0
      %24 = vst [vmem:[#allocation2 + $0x20] sm:$0xff] 0.0
      %25 = vst [vmem:[#allocation2 + $0x28] sm:$0xff] 0.0
      %26 = vst [vmem:[#allocation2 + $0x30] sm:$0xff] 0.0
      %27 = vst [vmem:[#allocation2 + $0x38] sm:$0xff] 0.0
      %28 = vst [vmem:[#allocation2 + $0x40] sm:$0xff] 0.0
      %29 = vst [vmem:[#allocation2 + $0x48] sm:$0xff] 0.0
      %30 = vst [vmem:[#allocation2 + $0x50] sm:$0xff] 0.0
      %31 = vst [vmem:[#allocation2 + $0x58] sm:$0xff] 0.0
      %32 = vst [vmem:[#allocation2 + $0x60] sm:$0xff] 0.0
      %33 = vst [vmem:[#allocation2 + $0x68] sm:$0xff] 0.0
      %34 = vst [vmem:[#allocation2 + $0x70] sm:$0xff] 0.0
      %35 = vst [vmem:[#allocation2 + $0x78] sm:$0xff] 0.0
    $region17: #{tpu_custom_call.1} parent=1 // pred_fallthru
      _
    %v36 = vld [vmem:[#allocation2] sm:$0xff]
    %v37 = vld [vmem:[#allocation2 + $0x8] sm:$0xff]
    %v38 = vld [vmem:[#allocation2 + $0x10] sm:$0xff]
    %v39 = vld [vmem:[#allocation2 + $0x18] sm:$0xff]
    %v40 = vld [vmem:[#allocation2 + $0x20] sm:$0xff]
    %v41 = vld [vmem:[#allocation2 + $0x28] sm:$0xff]
    %v42 = vld [vmem:[#allocation2 + $0x30] sm:$0xff]
    %v43 = vld [vmem:[#allocation2 + $0x38] sm:$0xff]
    %v44 = vld [vmem:[#allocation2 + $0x40] sm:$0xff]
    %v45 = vld [vmem:[#allocation2 + $0x48] sm:$0xff]
    %v46 = vld [vmem:[#allocation2 + $0x50] sm:$0xff]
    %v47 = vld [vmem:[#allocation2 + $0x58] sm:$0xff]
    %v48 = vld [vmem:[#allocation2 + $0x60] sm:$0xff]
    %v49 = vld [vmem:[#allocation2 + $0x68] sm:$0xff]
    %v50 = vld [vmem:[#allocation2 + $0x70] sm:$0xff]
    %v51 = vld [vmem:[#allocation2 + $0x78] sm:$0xff]
    %v52 = vld [vmem:[%s0] sm:$0xff]
    %v53 = vld [vmem:[%s0 + $0x8] sm:$0xff]
    %v54 = vld [vmem:[%s0 + $0x10] sm:$0xff]
    %v55 = vld [vmem:[%s0 + $0x18] sm:$0xff]
    %v56 = vld [vmem:[%s0 + $0x20] sm:$0xff]
    %v57 = vld [vmem:[%s0 + $0x28] sm:$0xff]
    %v58 = vld [vmem:[%s0 + $0x30] sm:$0xff]
    %v59 = vld [vmem:[%s0 + $0x38] sm:$0xff]
    %v60 = vld [vmem:[%s0 + $0x40] sm:$0xff]
    %v61 = vld [vmem:[%s0 + $0x48] sm:$0xff]
    %v62 = vld [vmem:[%s0 + $0x50] sm:$0xff]
    %v63 = vld [vmem:[%s0 + $0x58] sm:$0xff]
    %v64 = vld [vmem:[%s0 + $0x60] sm:$0xff]
    %v65 = vld [vmem:[%s0 + $0x68] sm:$0xff]
    %v66 = vld [vmem:[%s0 + $0x70] sm:$0xff]
    %v67 = vld [vmem:[%s0 + $0x78] sm:$0xff]
    %v68 = vld [vmem:[%s1] sm:$0xf]
    %v69 = vld [vmem:[%s1 + $0x4] sm:$0xf]
    %v70 = vld [vmem:[%s1 + $0x8] sm:$0xf]
    %v71 = vld [vmem:[%s1 + $0xc] sm:$0xf]
    %v72 = vld [vmem:[%s1 + $0x10] sm:$0xf]
    %v73 = vld [vmem:[%s1 + $0x14] sm:$0xf]
    %v74 = vld [vmem:[%s1 + $0x18] sm:$0xf]
    %v75 = vld [vmem:[%s1 + $0x1c] sm:$0xf]
    %v76 = vld [vmem:[%s1 + $0x20] sm:$0xf]
    %v77 = vld [vmem:[%s1 + $0x24] sm:$0xf]
    %v78 = vld [vmem:[%s1 + $0x28] sm:$0xf]
    %v79 = vld [vmem:[%s1 + $0x2c] sm:$0xf]
    %v80 = vld [vmem:[%s1 + $0x30] sm:$0xf]
    %v81 = vld [vmem:[%s1 + $0x34] sm:$0xf]
    %v82 = vld [vmem:[%s1 + $0x38] sm:$0xf]
    %v83 = vld [vmem:[%s1 + $0x3c] sm:$0xf]
    %v84 = vld [vmem:[%s1 + $0x40] sm:$0xf]
    %v85 = vld [vmem:[%s1 + $0x44] sm:$0xf]
    %v86 = vld [vmem:[%s1 + $0x48] sm:$0xf]
    %v103 = vunpack.c.l.b16 %v52
    %v104 = vunpack.c.h.b16 %v52
    %v105 = vunpack.c.l.b16 %v53
    %v106 = vunpack.c.h.b16 %v53
    %v107 = vunpack.c.l.b16 %v54
    %v108 = vunpack.c.h.b16 %v54
    %v109 = vunpack.c.l.b16 %v55
    %v110 = vunpack.c.h.b16 %v55
    %v111 = vunpack.c.l.b16 %v56
    %v112 = vunpack.c.h.b16 %v56
    %v113 = vunpack.c.l.b16 %v57
    %v114 = vunpack.c.h.b16 %v57
    %v115 = vunpack.c.l.b16 %v58
    %v116 = vunpack.c.h.b16 %v58
    %v117 = vunpack.c.l.b16 %v59
    %v118 = vunpack.c.h.b16 %v59
    %v119 = vunpack.c.l.b16 %v60
    %v120 = vunpack.c.h.b16 %v60
    %v121 = vunpack.c.l.b16 %v61
    %v122 = vunpack.c.h.b16 %v61
    %v123 = vunpack.c.l.b16 %v62
    %v124 = vunpack.c.h.b16 %v62
    %v125 = vunpack.c.l.b16 %v63
    %v126 = vunpack.c.h.b16 %v63
    %v127 = vunpack.c.l.b16 %v64
    %v128 = vunpack.c.h.b16 %v64
    %v129 = vunpack.c.l.b16 %v65
    %v130 = vunpack.c.h.b16 %v65
    %v131 = vunpack.c.l.b16 %v66
    %v132 = vunpack.c.h.b16 %v66
    %v133 = vunpack.c.l.b16 %v67
    %v134 = vunpack.c.h.b16 %v67
    %v135 = vpack.c.b16 %v105, %v103
    %v136 = vpack.c.b16 %v106, %v104
    %v137 = vpack.c.b16 %v109, %v107
    %v138 = vpack.c.b16 %v110, %v108
    %v139 = vpack.c.b16 %v113, %v111
    %v140 = vpack.c.b16 %v114, %v112
    %v141 = vpack.c.b16 %v117, %v115
    %v142 = vpack.c.b16 %v118, %v116
    %v143 = vpack.c.b16 %v121, %v119
    %v144 = vpack.c.b16 %v122, %v120
    %v145 = vpack.c.b16 %v125, %v123
    %v146 = vpack.c.b16 %v126, %v124
    %v147 = vpack.c.b16 %v129, %v127
    %v148 = vpack.c.b16 %v130, %v128
    %v149 = vpack.c.b16 %v133, %v131
    %v150 = vpack.c.b16 %v134, %v132
    %v178 = vunpack.c.l.b16 %v68
    %v179 = vunpack.c.l.b16 %v69
    %v180 = vunpack.c.l.b16 %v70
    %v181 = vunpack.c.l.b16 %v71
    %v182 = vunpack.c.l.b16 %v72
    %v183 = vunpack.c.l.b16 %v73
    %v184 = vunpack.c.l.b16 %v74
    %v185 = vunpack.c.l.b16 %v75
    %v186 = vunpack.c.l.b16 %v76
    %v187 = vunpack.c.l.b16 %v77
    %v188 = vunpack.c.l.b16 %v78
    %v189 = vunpack.c.l.b16 %v79
    %v190 = vunpack.c.l.b16 %v80
    %v191 = vunpack.c.l.b16 %v81
    %v192 = vunpack.c.l.b16 %v82
    %v193 = vunpack.c.l.b16 %v83
    %v194 = vunpack.c.l.b16 %v84
    %v195 = vunpack.c.l.b16 %v85
    %v196 = vunpack.c.l.b16 %v86
    %v197 = vpack.c.b16 %v179, %v178
    %v198 = vpack.c.b16 %v181, %v180
    %v199 = vpack.c.b16 %v183, %v182
    %v200 = vpack.c.b16 %v185, %v184
    %v201 = vpack.c.b16 %v187, %v186
    %v202 = vpack.c.b16 %v189, %v188
    %v203 = vpack.c.b16 %v191, %v190
    %v204 = vpack.c.b16 %v193, %v192
    %v205 = vpack.c.b16 %v195, %v194
    %v206 = vpack.c.b16 %v196, %v196
    %vm216 = vcmask 195584
    %v218 = vsel %vm216, %v136, 0
    %v221 = vsel %vm216, %v138, 0
    %v224 = vsel %vm216, %v140, 0
    %v227 = vsel %vm216, %v142, 0
    %v230 = vsel %vm216, %v144, 0
    %v233 = vsel %vm216, %v146, 0
    %v236 = vsel %vm216, %v148, 0
    %v239 = vsel %vm216, %v150, 0
    %vm241 = vcmask 1043456
    %v243 = vsel %vm241, %v206, 0
    %245 = vmatprep.subr.bf16.mxu0 0
    %246 = vmatpush1.bf16.msra.mxu0 %v197
    %247 = vmatprep.subr.bf16.mxu0 0
    %248 = vmatpush1.bf16.msra.mxu0 %v198
    %249 = vmatprep.subr.bf16.mxu0 0
    %250 = vmatpush1.bf16.msra.mxu0 %v199
    %251 = vmatprep.subr.bf16.mxu0 0
    %252 = vmatpush1.bf16.msra.mxu0 %v200
    %253 = vmatprep.subr.bf16.mxu0 0
    %254 = vmatpush1.bf16.msra.mxu0 %v201
    %255 = vmatprep.subr.bf16.mxu0 0
    %256 = vmatpush1.bf16.msra.mxu0 %v202
    %257 = vmatprep.subr.bf16.mxu0 0
    %258 = vmatpush1.bf16.msra.mxu0 %v203
    %259 = vmatprep.subr.bf16.mxu0 0
    %260 = vmatpush1.bf16.msra.mxu0 %v204
    %261 = vmatprep.subr.bf16.mxu0 0
    %262 = vmatpush1.bf16.msra.mxu0 %v205
    %263 = vmatprep.subr.bf16.mxu0 0
    %264 = vmatpush1.bf16.msra.mxu0 %v243
    %265 = vmatprep.subr.bf16.mxu0 0
    %266 = vmatpush1.bf16.msra.mxu0 0
    %267 = vmatprep.subr.bf16.mxu0 0
    %268 = vmatpush1.bf16.msra.mxu0 0
    %269 = vmatprep.subr.bf16.mxu0 0
    %270 = vmatpush1.bf16.msra.mxu0 0
    %271 = vmatprep.subr.bf16.mxu0 0
    %272 = vmatpush1.bf16.msra.mxu0 0
    %273 = vmatprep.subr.bf16.mxu0 0
    %274 = vmatpush1.bf16.msra.mxu0 0
    %275 = vmatprep.subr.bf16.mxu0 0
    %276 = vmatpush1.bf16.msra.mxu0 0
    %277 = vmatprep.mubr.bf16.mxu0 %v218
    %278 = vmatmul.mubr.bf16.gmra.mrb[0].mxu0 %v135
    %v279 = vpop.f32.mrb[0].mxu0
    %v280 = vadd.f32 0.0, %v279
    %v281 = vpop.f32.mrb[0].mxu0
    %v282 = vpop.f32.mrb[0].mxu0
    %v283 = vadd.f32 0.0, %v282
    %v284 = vpop.f32.mrb[0].mxu0
    %285 = vmatprep.mubr.bf16.mxu0 %v221
    %286 = vmatmul.mubr.bf16.gmra.mrb[0].mxu0 %v137
    %v287 = vpop.f32.mrb[0].mxu0
    %v288 = vadd.f32 0.0, %v287
    %v289 = vpop.f32.mrb[0].mxu0
    %v290 = vpop.f32.mrb[0].mxu0
    %v291 = vadd.f32 0.0, %v290
    %v292 = vpop.f32.mrb[0].mxu0
    %293 = vmatprep.mubr.bf16.mxu0 %v224
    %294 = vmatmul.mubr.bf16.gmra.mrb[0].mxu0 %v139
    %v295 = vpop.f32.mrb[0].mxu0
    %v296 = vadd.f32 0.0, %v295
    %v297 = vpop.f32.mrb[0].mxu0
    %v298 = vpop.f32.mrb[0].mxu0
    %v299 = vadd.f32 0.0, %v298
    %v300 = vpop.f32.mrb[0].mxu0
    %301 = vmatprep.mubr.bf16.mxu0 %v227
    %302 = vmatmul.mubr.bf16.gmra.mrb[0].mxu0 %v141
    %v303 = vpop.f32.mrb[0].mxu0
    %v304 = vadd.f32 0.0, %v303
    %v305 = vpop.f32.mrb[0].mxu0
    %v306 = vpop.f32.mrb[0].mxu0
    %v307 = vadd.f32 0.0, %v306
    %v308 = vpop.f32.mrb[0].mxu0
    %309 = vmatprep.mubr.bf16.mxu0 %v230
    %310 = vmatmul.mubr.bf16.gmra.mrb[0].mxu0 %v143
    %v311 = vpop.f32.mrb[0].mxu0
    %v312 = vadd.f32 0.0, %v311
    %v313 = vpop.f32.mrb[0].mxu0
    %v314 = vpop.f32.mrb[0].mxu0
    %v315 = vadd.f32 0.0, %v314
    %v316 = vpop.f32.mrb[0].mxu0
    %317 = vmatprep.mubr.bf16.mxu0 %v233
    %318 = vmatmul.mubr.bf16.gmra.mrb[0].mxu0 %v145
    %v319 = vpop.f32.mrb[0].mxu0
    %v320 = vadd.f32 0.0, %v319
    %v321 = vpop.f32.mrb[0].mxu0
    %v322 = vpop.f32.mrb[0].mxu0
    %v323 = vadd.f32 0.0, %v322
    %v324 = vpop.f32.mrb[0].mxu0
    %325 = vmatprep.mubr.bf16.mxu0 %v236
    %326 = vmatmul.mubr.bf16.gmra.mrb[0].mxu0 %v147
    %v327 = vpop.f32.mrb[0].mxu0
    %v328 = vadd.f32 0.0, %v327
    %v329 = vpop.f32.mrb[0].mxu0
    %v330 = vpop.f32.mrb[0].mxu0
    %v331 = vadd.f32 0.0, %v330
    %v332 = vpop.f32.mrb[0].mxu0
    %333 = vmatprep.mubr.bf16.mxu0 %v239
    %334 = vmatmul.mubr.bf16.gmra.mrb[0].mxu0 %v149
    %v335 = vpop.f32.mrb[0].mxu0
    %v336 = vadd.f32 0.0, %v335
    %v337 = vpop.f32.mrb[0].mxu0
    %v338 = vpop.f32.mrb[0].mxu0
    %v339 = vadd.f32 0.0, %v338
    %v340 = vpop.f32.mrb[0].mxu0
    %341 = vdwg.mxu0
    %v342 = vadd.f32 %v36, %v280
    %v343 = vadd.f32 %v37, %v283
    %v344 = vadd.f32 %v38, %v288
    %v345 = vadd.f32 %v39, %v291
    %v346 = vadd.f32 %v40, %v296
    %v347 = vadd.f32 %v41, %v299
    %v348 = vadd.f32 %v42, %v304
    %v349 = vadd.f32 %v43, %v307
    %v350 = vadd.f32 %v44, %v312
    %v351 = vadd.f32 %v45, %v315
    %v352 = vadd.f32 %v46, %v320
    %v353 = vadd.f32 %v47, %v323
    %v354 = vadd.f32 %v48, %v328
    %v355 = vadd.f32 %v49, %v331
    %v356 = vadd.f32 %v50, %v336
    %v357 = vadd.f32 %v51, %v339
    %358 = vst [vmem:[#allocation2] sm:$0xff] %v342
    %359 = vst [vmem:[#allocation2 + $0x8] sm:$0xff] %v343
    %360 = vst [vmem:[#allocation2 + $0x10] sm:$0xff] %v344
    %361 = vst [vmem:[#allocation2 + $0x18] sm:$0xff] %v345
    %362 = vst [vmem:[#allocation2 + $0x20] sm:$0xff] %v346
    %363 = vst [vmem:[#allocation2 + $0x28] sm:$0xff] %v347
    %364 = vst [vmem:[#allocation2 + $0x30] sm:$0xff] %v348
    %365 = vst [vmem:[#allocation2 + $0x38] sm:$0xff] %v349
    %366 = vst [vmem:[#allocation2 + $0x40] sm:$0xff] %v350
    %367 = vst [vmem:[#allocation2 + $0x48] sm:$0xff] %v351
    %368 = vst [vmem:[#allocation2 + $0x50] sm:$0xff] %v352
    %369 = vst [vmem:[#allocation2 + $0x58] sm:$0xff] %v353
    %370 = vst [vmem:[#allocation2 + $0x60] sm:$0xff] %v354
    %371 = vst [vmem:[#allocation2 + $0x68] sm:$0xff] %v355
    %372 = vst [vmem:[#allocation2 + $0x70] sm:$0xff] %v356
    %373 = vst [vmem:[#allocation2 + $0x78] sm:$0xff] %v357
    // Predicated region
    $region18: #{tpu_custom_call.1} parent=1 // pred_check
      %p374 = pneg %p16
    $region19: #{tpu_custom_call.1} parent=1 // pred_check_branch
      %376 = sbr.rel (%p374) target = $region21
    $region20: #{tpu_custom_call.1} parent=1 // pred_region
      %v377 = vld [vmem:[#allocation2] sm:$0xff]
      %v378 = vld [vmem:[#allocation2 + $0x8] sm:$0xff]
      %v379 = vld [vmem:[#allocation2 + $0x10] sm:$0xff]
      %v380 = vld [vmem:[#allocation2 + $0x18] sm:$0xff]
      %v381 = vld [vmem:[#allocation2 + $0x20] sm:$0xff]
      %v382 = vld [vmem:[#allocation2 + $0x28] sm:$0xff]
      %v383 = vld [vmem:[#allocation2 + $0x30] sm:$0xff]
      %v384 = vld [vmem:[#allocation2 + $0x38] sm:$0xff]
      %v385 = vld [vmem:[#allocation2 + $0x40] sm:$0xff]
      %v386 = vld [vmem:[#allocation2 + $0x48] sm:$0xff]
      %v387 = vld [vmem:[#allocation2 + $0x50] sm:$0xff]
      %v388 = vld [vmem:[#allocation2 + $0x58] sm:$0xff]
      %v389 = vld [vmem:[#allocation2 + $0x60] sm:$0xff]
      %v390 = vld [vmem:[#allocation2 + $0x68] sm:$0xff]
      %v391 = vld [vmem:[#allocation2 + $0x70] sm:$0xff]
      %v392 = vld [vmem:[#allocation2 + $0x78] sm:$0xff]
      %v393 = vld [vmem:[%s2] sm:$0x1]
      %v395 = vlaneseq
      %v396 = vshrl.u32 %v395, 7
      %v397 = vsub.s32 0, %v396
      %v398 = vrot.slane %v393, %v397
      %v400 = vadd.f32 %v377, %v398
      %v401 = vadd.f32 %v378, %v398
      %v402 = vadd.f32 %v379, %v398
      %v403 = vadd.f32 %v380, %v398
      %v404 = vadd.f32 %v381, %v398
      %v405 = vadd.f32 %v382, %v398
      %v406 = vadd.f32 %v383, %v398
      %v407 = vadd.f32 %v384, %v398
      %v408 = vadd.f32 %v385, %v398
      %v409 = vadd.f32 %v386, %v398
      %v410 = vadd.f32 %v387, %v398
      %v411 = vadd.f32 %v388, %v398
      %v412 = vadd.f32 %v389, %v398
      %v413 = vadd.f32 %v390, %v398
      %v414 = vadd.f32 %v391, %v398
      %v415 = vadd.f32 %v392, %v398
      %v416 = vmax.f32 %v400, 0.0
      %v417 = vmax.f32 %v401, 0.0
      %v418 = vmax.f32 %v402, 0.0
      %v419 = vmax.f32 %v403, 0.0
      %v420 = vmax.f32 %v404, 0.0
      %v421 = vmax.f32 %v405, 0.0
      %v422 = vmax.f32 %v406, 0.0
      %v423 = vmax.f32 %v407, 0.0
      %v424 = vmax.f32 %v408, 0.0
      %v425 = vmax.f32 %v409, 0.0
      %v426 = vmax.f32 %v410, 0.0
      %v427 = vmax.f32 %v411, 0.0
      %v428 = vmax.f32 %v412, 0.0
      %v429 = vmax.f32 %v413, 0.0
      %v430 = vmax.f32 %v414, 0.0
      %v431 = vmax.f32 %v415, 0.0
      %v432 = vpack.c.bf16 %v417, %v416
      %v433 = vpack.c.bf16 %v419, %v418
      %v434 = vpack.c.bf16 %v421, %v420
      %v435 = vpack.c.bf16 %v423, %v422
      %v436 = vpack.c.bf16 %v425, %v424
      %v437 = vpack.c.bf16 %v427, %v426
      %v438 = vpack.c.bf16 %v429, %v428
      %v439 = vpack.c.bf16 %v431, %v430
      %v448 = vunpack.c.l.b16 %v432
      %v449 = vunpack.c.h.b16 %v432
      %v450 = vunpack.c.l.b16 %v433
      %v451 = vunpack.c.h.b16 %v433
      %v452 = vunpack.c.l.b16 %v434
      %v453 = vunpack.c.h.b16 %v434
      %v454 = vunpack.c.l.b16 %v435
      %v455 = vunpack.c.h.b16 %v435
      %v456 = vunpack.c.l.b16 %v436
      %v457 = vunpack.c.h.b16 %v436
      %v458 = vunpack.c.l.b16 %v437
      %v459 = vunpack.c.h.b16 %v437
      %v460 = vunpack.c.l.b16 %v438
      %v461 = vunpack.c.h.b16 %v438
      %v462 = vunpack.c.l.b16 %v439
      %v463 = vunpack.c.h.b16 %v439
      %v464 = vpack.c.b16 %v448, %v448
      %v465 = vpack.c.b16 %v449, %v449
      %v466 = vpack.c.b16 %v450, %v450
      %v467 = vpack.c.b16 %v451, %v451
      %v468 = vpack.c.b16 %v452, %v452
      %v469 = vpack.c.b16 %v453, %v453
      %v470 = vpack.c.b16 %v454, %v454
      %v471 = vpack.c.b16 %v455, %v455
      %v472 = vpack.c.b16 %v456, %v456
      %v473 = vpack.c.b16 %v457, %v457
      %v474 = vpack.c.b16 %v458, %v458
      %v475 = vpack.c.b16 %v459, %v459
      %v476 = vpack.c.b16 %v460, %v460
      %v477 = vpack.c.b16 %v461, %v461
      %v478 = vpack.c.b16 %v462, %v462
      %v479 = vpack.c.b16 %v463, %v463
      %496 = vst [vmem:[#allocation3] sm:$0xf] %v464
      %497 = vst [vmem:[#allocation3 + $0x4] sm:$0xf] %v465
      %498 = vst [vmem:[#allocation3 + $0x8] sm:$0xf] %v466
      %499 = vst [vmem:[#allocation3 + $0xc] sm:$0xf] %v467
      %500 = vst [vmem:[#allocation3 + $0x10] sm:$0xf] %v468
      %501 = vst [vmem:[#allocation3 + $0x14] sm:$0xf] %v469
      %502 = vst [vmem:[#allocation3 + $0x18] sm:$0xf] %v470
      %503 = vst [vmem:[#allocation3 + $0x1c] sm:$0xf] %v471
      %504 = vst [vmem:[#allocation3 + $0x20] sm:$0xf] %v472
      %505 = vst [vmem:[#allocation3 + $0x24] sm:$0xf] %v473
      %506 = vst [vmem:[#allocation3 + $0x28] sm:$0xf] %v474
      %507 = vst [vmem:[#allocation3 + $0x2c] sm:$0xf] %v475
      %508 = vst [vmem:[#allocation3 + $0x30] sm:$0xf] %v476
      %509 = vst [vmem:[#allocation3 + $0x34] sm:$0xf] %v477
      %510 = vst [vmem:[#allocation3 + $0x38] sm:$0xf] %v478
      %511 = vst [vmem:[#allocation3 + $0x3c] sm:$0xf] %v479
    $region21: #{tpu_custom_call.1} parent=1 // pred_fallthru
      _
    // Predicated region
    $region22: #{tpu_custom_call.1} parent=1 // pred_check
      _
    $region23: #{tpu_custom_call.1} parent=1 // pred_check_branch
      %513 = sbr.rel (0) target = $region25
    $region24: #{tpu_custom_call.1} parent=1 // pred_region
      %s515 = ssub.s32 1024, 1024
      %516 = vsyncadd [#allocation4], %s515
      %s517 = sshll.u32 [#allocation3], 4
      %s518 = int_to_ptr.vmem [resolvable:$true] %s517
      %523 = dma.vmem_to_hbm [thread:$0]  %s518, 1024, %s3, [#allocation4], 64, 64, 4
    $region25: #{tpu_custom_call.1} parent=1 // pred_fallthru
      _
    // Predicated region
    $region26: #{tpu_custom_call.1} parent=1 // pred_check
      _
    $region27: #{tpu_custom_call.1} parent=1 // pred_check_branch
      %525 = sbr.rel (0) target = $region29
    $region28: #{tpu_custom_call.1} parent=1 // pred_region
      %526 = dma.done [#allocation4], 1024
    $region29: #{tpu_custom_call.1} parent=1 // pred_fallthru
      _
    %527 = vsyncpa [#allocation4], 1

</llo_original>
